<compile_context>
chip_gen: v6e
topology: v6e:2x2x1
jax: 0.10.0
libtpu: 0.0.40
codegen_flags: <defaults>
</compile_context>

<pallas_src>
import math

import jax
import jax.numpy as jnp
from jax import lax
from jax.experimental import pallas as pl
from jax.experimental.pallas import tpu as pltpu

_NEG_BIG = -1e30  # plain Python float: no traced-constant capture in kernel


def _flash_attention_kernel(bias_ref, q_ref, k_ref, v_ref, o_ref,
                            m_scr, l_scr, acc_scr):
    ki = pl.program_id(3)

    @pl.when(ki == 0)
    def _():
        m_scr[...] = jnp.full_like(m_scr, _NEG_BIG)
        l_scr[...] = jnp.zeros_like(l_scr)
        acc_scr[...] = jnp.zeros_like(acc_scr)

    q = q_ref[...]      # (hg, tq, D)  bf16, pre-scaled by 1/sqrt(D)
    k = k_ref[...]      # (hg, tkv, D) bf16
    v = v_ref[...]      # (hg, tkv, D) bf16
    bias = bias_ref[...].astype(jnp.float32)   # (tq, tkv): 0 keep / -1e30 mask

    # scores = (Q/sqrt(D)) @ K^T, batched over the head group on the MXU.
    s = lax.dot_general(q, k, (((2,), (2,)), ((0,), (0,))),
                        preferred_element_type=jnp.float32)
    s = s + bias[None, :, :]                   # additive mask bias

    # online softmax update (all in f32)
    # TODO(synk): on v6e/v7x the exp could run in bf16 on the EUP for ~2x
    #             throughput; kept f32 here for cross-generation accuracy.
    m_prev = m_scr[...]
    m_new = jnp.maximum(m_prev, jnp.max(s, axis=-1, keepdims=True))
    corr = jnp.exp(m_prev - m_new)
    p = jnp.exp(s - m_new)
    l_scr[...] = corr * l_scr[...] + jnp.sum(p, axis=-1, keepdims=True)
    acc_scr[...] = corr * acc_scr[...] + lax.dot_general(
        p.astype(v.dtype), v, (((2,), (1,)), ((0,), (0,))),
        preferred_element_type=jnp.float32)
    m_scr[...] = m_new

    # TODO(synk): dropout with p > 0 not implemented; module runs with
    #             pDropout = 0.0 (deterministic eval-style forward).

    @pl.when(ki == pl.num_programs(3) - 1)
    def _():
        l = l_scr[...]
        inv_l = jnp.where(l > 0.0, pl.reciprocal(l, approx=True), 0.0)
        o_ref[...] = (acc_scr[...] * inv_l).astype(o_ref.dtype)


def _round_up(x, m):
    return ((x + m - 1) // m) * m


def _head_group(n_heads):
    for hg in (4, 2, 1):
        if n_heads % hg == 0:
            return hg
    return 1


def attention_forward(query, key, value, mask=None):
    """Pallas equivalent of attention(pDropout=0.0).forward(query, key, value, mask)."""
    B, H, S, D = query.shape
    out_dtype = query.dtype

    # ---- tile / padding choices (no full-S fallback cliff) ----
    if S > 512:
        tq, tkv = 512, 256
        s_pad = _round_up(S, 512)
    else:
        tq = tkv = _round_up(S, 8)
        s_pad = tq
    hg = _head_group(H)
    pad = s_pad - S

    # ---- additive bias: 0 = keep, -1e30 = masked; col 0 always kept ----
    if mask is None:
        bias = jnp.zeros((B, S, S), dtype=jnp.bfloat16)
    else:
        bias = jnp.where(mask.astype(bool), 0.0, _NEG_BIG).astype(jnp.bfloat16)
    if pad:
        bias = jnp.pad(bias, ((0, 0), (0, pad), (0, pad)),
                       constant_values=_NEG_BIG)
    bias = bias.at[:, :, 0].set(0.0)            # mask[:, :, 0] = True

    # ---- fold 1/sqrt(D) into Q (f32), feed MXU in bf16 ----
    scale = 1.0 / math.sqrt(D)
    q = (query.astype(jnp.float32) * scale).astype(jnp.bfloat16)
    k = key.astype(jnp.bfloat16)
    v = value.astype(jnp.bfloat16)
    if pad:
        q = jnp.pad(q, ((0, 0), (0, 0), (0, pad), (0, 0)))
        k = jnp.pad(k, ((0, 0), (0, 0), (0, pad), (0, 0)))
        v = jnp.pad(v, ((0, 0), (0, 0), (0, pad), (0, 0)))

    grid = (B, H // hg, s_pad // tq, s_pad // tkv)

    bias_spec = pl.BlockSpec((None, tq, tkv),
                             lambda b, h, qi, ki: (b, qi, ki))
    q_spec = pl.BlockSpec((None, hg, tq, D),
                          lambda b, h, qi, ki: (b, h, qi, 0))
    kv_spec = pl.BlockSpec((None, hg, tkv, D),
                           lambda b, h, qi, ki: (b, h, ki, 0))
    out_spec = pl.BlockSpec((None, hg, tq, D),
                            lambda b, h, qi, ki: (b, h, qi, 0))

    out = pl.pallas_call(
        _flash_attention_kernel,
        out_shape=jax.ShapeDtypeStruct((B, H, s_pad, D), out_dtype),
        grid_spec=pltpu.PrefetchScalarGridSpec(
            num_scalar_prefetch=0,
            grid=grid,
            in_specs=[bias_spec, q_spec, kv_spec, kv_spec],
            out_specs=out_spec,
            scratch_shapes=[
                pltpu.VMEM((hg, tq, 1), jnp.float32),   # running max m
                pltpu.VMEM((hg, tq, 1), jnp.float32),   # running denom l
                pltpu.VMEM((hg, tq, D), jnp.float32),   # output accumulator
            ]),
        compiler_params=pltpu.CompilerParams(
            dimension_semantics=("parallel", "parallel", "parallel",
                                 "arbitrary")),
    )(bias, q, k, v)

    if pad:
        out = out[:, :, :S, :]
    return out


def _reference(query, key, value, mask):
    """Plain-JAX reference reproducing the PyTorch forward (pDropout=0)."""
    B, H, S, D = query.shape
    scores = jnp.einsum("bhqd,bhkd->bhqk", query, key) / math.sqrt(D)
    if mask is not None:
        m = mask.astype(bool).at[:, :, 0].set(True)[:, None, :, :]
        scores = jnp.where(m, scores, -jnp.inf)
    alpha = jax.nn.softmax(scores, axis=-1)
    return jnp.einsum("bhqk,bhkd->bhqd", alpha, value)


if __name__ == "__main__":
    # --- primary test: shapes from the PyTorch module convention ---
    B, H, S, D = 2, 2, 8, 16
    k0 = jax.random.PRNGKey(0)
    kq, kk, kv, km = jax.random.split(k0, 4)
    query = jax.random.normal(kq, (B, H, S, D), dtype=jnp.float32)
    key = jax.random.normal(kk, (B, H, S, D), dtype=jnp.float32)
    value = jax.random.normal(kv, (B, H, S, D), dtype=jnp.float32)
    mask = (jax.random.uniform(km, (B, S, S)) > 0.3)   # bool, 1 = keep

    out = jax.block_until_ready(attention_forward(query, key, value, mask))
    ref = _reference(query, key, value, mask)
    assert out.shape == (B, H, S, D)
    assert jnp.allclose(out, ref, atol=2e-2, rtol=2e-2), (
        float(jnp.max(jnp.abs(out - ref))))

    # --- secondary test: non-multiple-of-8 S exercises the padding path,
    #     H=4 exercises the head-group-of-4 path ---
    B2, H2, S2, D2 = 1, 4, 12, 8
    k1 = jax.random.PRNGKey(1)
    kq2, kk2, kv2, km2 = jax.random.split(k1, 4)
    q2 = jax.random.normal(kq2, (B2, H2, S2, D2), dtype=jnp.float32)
    k2 = jax.random.normal(kk2, (B2, H2, S2, D2), dtype=jnp.float32)
    v2 = jax.random.normal(kv2, (B2, H2, S2, D2), dtype=jnp.float32)
    m2 = (jax.random.uniform(km2, (B2, S2, S2)) > 0.3)

    out2 = jax.block_until_ready(attention_forward(q2, k2, v2, m2))
    ref2 = _reference(q2, k2, v2, m2)
    assert out2.shape == (B2, H2, S2, D2)
    assert jnp.allclose(out2, ref2, atol=2e-2, rtol=2e-2), (
        float(jnp.max(jnp.abs(out2 - ref2))))

    print("KERNEL_OK")
</pallas_src>

<mosaic_0001>
module attributes {stable_mosaic.version = 11 : i64} {
  func.func @_flash_attention_kernel(%arg0: i32, %arg1: i32, %arg2: i32, %arg3: i32, %arg4: memref<1x8x8xbf16, #tpu.memory_space<vmem>>, %arg5: memref<1x2x8x16xbf16, #tpu.memory_space<vmem>>, %arg6: memref<1x2x8x16xbf16, #tpu.memory_space<vmem>>, %arg7: memref<1x2x8x16xbf16, #tpu.memory_space<vmem>>, %arg8: memref<1x2x8x16xf32, #tpu.memory_space<vmem>>, %arg9: memref<2x8x1xf32, #tpu.memory_space<vmem>>, %arg10: memref<2x8x1xf32, #tpu.memory_space<vmem>>, %arg11: memref<2x8x16xf32, #tpu.memory_space<vmem>>) attributes {dimension_semantics = [#tpu.dimension_semantics<parallel>, #tpu.dimension_semantics<parallel>, #tpu.dimension_semantics<parallel>, #tpu.dimension_semantics<arbitrary>], iteration_bounds = array<i64: 2, 1, 1, 1>, scalar_prefetch = 0 : i64, scratch_operands = 3 : i64, tpu.core_type = #tpu.core_type<tc>, window_params = [{transform_indices = @transform_0, window_bounds = array<i64: 1, 8, 8>}, {transform_indices = @transform_1, window_bounds = array<i64: 1, 2, 8, 16>}, {transform_indices = @transform_2, window_bounds = array<i64: 1, 2, 8, 16>}, {transform_indices = @transform_3, window_bounds = array<i64: 1, 2, 8, 16>}, {transform_indices = @transform_4, window_bounds = array<i64: 1, 2, 8, 16>}]} {
    %c0_i32 = arith.constant 0 : i32
    %0 = arith.cmpi eq, %arg3, %c0_i32 : i32
    %1 = arith.extui %0 : i1 to i32
    %c0_i32_0 = arith.constant 0 : i32
    %2 = arith.cmpi ne, %1, %c0_i32_0 : i32
    scf.if %2 {
      %cst_38 = arith.constant -1.000000e+30 : f32
      %42 = vector.broadcast %cst_38 : f32 to vector<2x8x1xf32>
      %c0_39 = arith.constant 0 : index
      %c0_40 = arith.constant 0 : index
      %c0_41 = arith.constant 0 : index
      %43 = vector.load %arg9[%c0_39, %c0_40, %c0_41] : memref<2x8x1xf32, #tpu.memory_space<vmem>>, vector<2x8x1xf32>
      tpu.vector_store %arg9[%c0_39, %c0_40, %c0_41], %42 {strides = array<i32>} : memref<2x8x1xf32, #tpu.memory_space<vmem>>, vector<2x8x1xf32>,
      %cst_42 = arith.constant 0.000000e+00 : f32
      %44 = vector.broadcast %cst_42 : f32 to vector<2x8x1xf32>
      %c0_43 = arith.constant 0 : index
      %c0_44 = arith.constant 0 : index
      %c0_45 = arith.constant 0 : index
      %45 = vector.load %arg10[%c0_43, %c0_44, %c0_45] : memref<2x8x1xf32, #tpu.memory_space<vmem>>, vector<2x8x1xf32>
      tpu.vector_store %arg10[%c0_43, %c0_44, %c0_45], %44 {strides = array<i32>} : memref<2x8x1xf32, #tpu.memory_space<vmem>>, vector<2x8x1xf32>,
      %cst_46 = arith.constant 0.000000e+00 : f32
      %46 = vector.broadcast %cst_46 : f32 to vector<2x8x16xf32>
      %c0_47 = arith.constant 0 : index
      %c0_48 = arith.constant 0 : index
      %c0_49 = arith.constant 0 : index
      %47 = vector.load %arg11[%c0_47, %c0_48, %c0_49] : memref<2x8x16xf32, #tpu.memory_space<vmem>>, vector<2x8x16xf32>
      tpu.vector_store %arg11[%c0_47, %c0_48, %c0_49], %46 {strides = array<i32>} : memref<2x8x16xf32, #tpu.memory_space<vmem>>, vector<2x8x16xf32>,
    } else {
    }
    %c0 = arith.constant 0 : index
    %c0_1 = arith.constant 0 : index
    %c0_2 = arith.constant 0 : index
    %c0_3 = arith.constant 0 : index
    %3 = vector.load %arg5[%c0, %c0_1, %c0_2, %c0_3] : memref<1x2x8x16xbf16, #tpu.memory_space<vmem>>, vector<1x2x8x16xbf16>
    %4 = vector.shape_cast %3 : vector<1x2x8x16xbf16> to vector<2x8x16xbf16>
    %c0_4 = arith.constant 0 : index
    %c0_5 = arith.constant 0 : index
    %c0_6 = arith.constant 0 : index
    %c0_7 = arith.constant 0 : index
    %5 = vector.load %arg6[%c0_4, %c0_5, %c0_6, %c0_7] : memref<1x2x8x16xbf16, #tpu.memory_space<vmem>>, vector<1x2x8x16xbf16>
    %6 = vector.shape_cast %5 : vector<1x2x8x16xbf16> to vector<2x8x16xbf16>
    %c0_8 = arith.constant 0 : index
    %c0_9 = arith.constant 0 : index
    %c0_10 = arith.constant 0 : index
    %c0_11 = arith.constant 0 : index
    %7 = vector.load %arg7[%c0_8, %c0_9, %c0_10, %c0_11] : memref<1x2x8x16xbf16, #tpu.memory_space<vmem>>, vector<1x2x8x16xbf16>
    %8 = vector.shape_cast %7 : vector<1x2x8x16xbf16> to vector<2x8x16xbf16>
    %c0_12 = arith.constant 0 : index
    %c0_13 = arith.constant 0 : index
    %c0_14 = arith.constant 0 : index
    %9 = vector.load %arg4[%c0_12, %c0_13, %c0_14] : memref<1x8x8xbf16, #tpu.memory_space<vmem>>, vector<1x8x8xbf16>
    %10 = vector.shape_cast %9 : vector<1x8x8xbf16> to vector<8x8xbf16>
    %11 = arith.extf %10 : vector<8x8xbf16> to vector<8x8xf32>
    %cst = arith.constant dense<0.000000e+00> : vector<2x8x8xf32>
    %12 = tpu.matmul %4, %6, %cst {dimension_numbers = #tpu.dot_dimension_numbers<[2], [2], [1], [1], [0, 0, 0, 1, 1, 1], [0], [0]>} : vector<2x8x16xbf16>, vector<2x8x16xbf16>, vector<2x8x8xf32> -> vector<2x8x8xf32>
    %13 = vector.shape_cast %11 : vector<8x8xf32> to vector<1x8x8xf32>
    %14 = vector.broadcast %13 : vector<1x8x8xf32> to vector<2x8x8xf32>
    %15 = arith.addf %12, %14 : vector<2x8x8xf32>
    %c0_15 = arith.constant 0 : index
    %c0_16 = arith.constant 0 : index
    %c0_17 = arith.constant 0 : index
    %16 = vector.load %arg9[%c0_15, %c0_16, %c0_17] : memref<2x8x1xf32, #tpu.memory_space<vmem>>, vector<2x8x1xf32>
    %cst_18 = arith.constant dense<0xFF800000> : vector<2x8xf32>
    %17 = vector.multi_reduction <maximumf>, %15, %cst_18 [2] : vector<2x8x8xf32> to vector<2x8xf32>
    %18 = vector.shape_cast %17 : vector<2x8xf32> to vector<2x8x1xf32>
    %19 = arith.maximumf %16, %18 : vector<2x8x1xf32>
    %20 = arith.subf %16, %19 : vector<2x8x1xf32>
    %21 = math.exp %20 : vector<2x8x1xf32>
    %22 = vector.broadcast %19 : vector<2x8x1xf32> to vector<2x8x8xf32>
    %23 = arith.subf %15, %22 : vector<2x8x8xf32>
    %24 = math.exp %23 : vector<2x8x8xf32>
    %c0_19 = arith.constant 0 : index
    %c0_20 = arith.constant 0 : index
    %c0_21 = arith.constant 0 : index
    %25 = vector.load %arg10[%c0_19, %c0_20, %c0_21] : memref<2x8x1xf32, #tpu.memory_space<vmem>>, vector<2x8x1xf32>
    %26 = arith.mulf %21, %25 : vector<2x8x1xf32>
    %cst_22 = arith.constant dense<0.000000e+00> : vector<2x8xf32>
    %27 = vector.multi_reduction <add>, %24, %cst_22 [2] : vector<2x8x8xf32> to vector<2x8xf32>
    %28 = vector.shape_cast %27 : vector<2x8xf32> to vector<2x8x1xf32>
    %29 = arith.addf %26, %28 : vector<2x8x1xf32>
    %c0_23 = arith.constant 0 : index
    %c0_24 = arith.constant 0 : index
    %c0_25 = arith.constant 0 : index
    %30 = vector.load %arg10[%c0_23, %c0_24, %c0_25] : memref<2x8x1xf32, #tpu.memory_space<vmem>>, vector<2x8x1xf32>
    tpu.vector_store %arg10[%c0_23, %c0_24, %c0_25], %29 {strides = array<i32>} : memref<2x8x1xf32, #tpu.memory_space<vmem>>, vector<2x8x1xf32>,
    %c0_26 = arith.constant 0 : index
    %c0_27 = arith.constant 0 : index
    %c0_28 = arith.constant 0 : index
    %31 = vector.load %arg11[%c0_26, %c0_27, %c0_28] : memref<2x8x16xf32, #tpu.memory_space<vmem>>, vector<2x8x16xf32>
    %32 = vector.broadcast %21 : vector<2x8x1xf32> to vector<2x8x16xf32>
    %33 = arith.mulf %32, %31 : vector<2x8x16xf32>
    %34 = arith.truncf %24 : vector<2x8x8xf32> to vector<2x8x8xbf16>
    %cst_29 = arith.constant dense<0.000000e+00> : vector<2x8x16xf32>
    %35 = tpu.matmul %34, %8, %cst_29 {dimension_numbers = #tpu.dot_dimension_numbers<[2], [1], [1], [2], [0, 0, 0, 1, 1, 2], [0], [0]>} : vector<2x8x8xbf16>, vector<2x8x16xbf16>, vector<2x8x16xf32> -> vector<2x8x16xf32>
    %36 = arith.addf %33, %35 : vector<2x8x16xf32>
    %c0_30 = arith.constant 0 : index
    %c0_31 = arith.constant 0 : index
    %c0_32 = arith.constant 0 : index
    %37 = vector.load %arg11[%c0_30, %c0_31, %c0_32] : memref<2x8x16xf32, #tpu.memory_space<vmem>>, vector<2x8x16xf32>
    tpu.vector_store %arg11[%c0_30, %c0_31, %c0_32], %36 {strides = array<i32>} : memref<2x8x16xf32, #tpu.memory_space<vmem>>, vector<2x8x16xf32>,
    %c0_33 = arith.constant 0 : index
    %c0_34 = arith.constant 0 : index
    %c0_35 = arith.constant 0 : index
    %38 = vector.load %arg9[%c0_33, %c0_34, %c0_35] : memref<2x8x1xf32, #tpu.memory_space<vmem>>, vector<2x8x1xf32>
    tpu.vector_store %arg9[%c0_33, %c0_34, %c0_35], %19 {strides = array<i32>} : memref<2x8x1xf32, #tpu.memory_space<vmem>>, vector<2x8x1xf32>,
    %c0_i32_36 = arith.constant 0 : i32
    %39 = arith.cmpi eq, %arg3, %c0_i32_36 : i32
    %40 = arith.extui %39 : i1 to i32
    %c0_i32_37 = arith.constant 0 : i32
    %41 = arith.cmpi ne, %40, %c0_i32_37 : i32
    scf.if %41 {
      %c0_38 = arith.constant 0 : index
      %c0_39 = arith.constant 0 : index
      %c0_40 = arith.constant 0 : index
      %42 = vector.load %arg10[%c0_38, %c0_39, %c0_40] : memref<2x8x1xf32, #tpu.memory_space<vmem>>, vector<2x8x1xf32>
      %cst_41 = arith.constant 0.000000e+00 : f32
      %43 = vector.broadcast %cst_41 : f32 to vector<2x8x1xf32>
      %44 = arith.cmpf ogt, %42, %43 : vector<2x8x1xf32>
      %45 = tpu.reciprocal %42 {approx = true} : vector<2x8x1xf32> -> vector<2x8x1xf32>
      %cst_42 = arith.constant 0.000000e+00 : f32
      %46 = vector.broadcast %cst_42 : f32 to vector<2x8x1xf32>
      %47 = arith.select %44, %45, %46 : vector<2x8x1xi1>, vector<2x8x1xf32>
      %c0_43 = arith.constant 0 : index
      %c0_44 = arith.constant 0 : index
      %c0_45 = arith.constant 0 : index
      %48 = vector.load %arg11[%c0_43, %c0_44, %c0_45] : memref<2x8x16xf32, #tpu.memory_space<vmem>>, vector<2x8x16xf32>
      %49 = vector.broadcast %47 : vector<2x8x1xf32> to vector<2x8x16xf32>
      %50 = arith.mulf %48, %49 : vector<2x8x16xf32>
      %c0_46 = arith.constant 0 : index
      %c0_47 = arith.constant 0 : index
      %c0_48 = arith.constant 0 : index
      %c0_49 = arith.constant 0 : index
      %51 = vector.load %arg8[%c0_46, %c0_47, %c0_48, %c0_49] : memref<1x2x8x16xf32, #tpu.memory_space<vmem>>, vector<1x2x8x16xf32>
      %52 = vector.shape_cast %51 : vector<1x2x8x16xf32> to vector<2x8x16xf32>
      %53 = vector.shape_cast %50 : vector<2x8x16xf32> to vector<1x2x8x16xf32>
      tpu.vector_store %arg8[%c0_46, %c0_47, %c0_48, %c0_49], %53 {strides = array<i32>} : memref<1x2x8x16xf32, #tpu.memory_space<vmem>>, vector<1x2x8x16xf32>,
    } else {
    }
    return
  }
  func.func @transform_0(%arg0: i32, %arg1: i32, %arg2: i32, %arg3: i32) -> (i32, i32, i32) {
    %c0_i32 = arith.constant 0 : i32
    return %arg0, %arg2, %arg3 : i32, i32, i32
  }
  func.func @transform_1(%arg0: i32, %arg1: i32, %arg2: i32, %arg3: i32) -> (i32, i32, i32, i32) {
    %c0_i32 = arith.constant 0 : i32
    %c0_i32_0 = arith.constant 0 : i32
    return %arg0, %arg1, %arg2, %c0_i32 : i32, i32, i32, i32
  }
  func.func @transform_2(%arg0: i32, %arg1: i32, %arg2: i32, %arg3: i32) -> (i32, i32, i32, i32) {
    %c0_i32 = arith.constant 0 : i32
    %c0_i32_0 = arith.constant 0 : i32
    return %arg0, %arg1, %arg3, %c0_i32 : i32, i32, i32, i32
  }
  func.func @transform_3(%arg0: i32, %arg1: i32, %arg2: i32, %arg3: i32) -> (i32, i32, i32, i32) {
    %c0_i32 = arith.constant 0 : i32
    %c0_i32_0 = arith.constant 0 : i32
    return %arg0, %arg1, %arg3, %c0_i32 : i32, i32, i32, i32
  }
  func.func @transform_4(%arg0: i32, %arg1: i32, %arg2: i32, %arg3: i32) -> (i32, i32, i32, i32) {
    %c0_i32 = arith.constant 0 : i32
    %c0_i32_0 = arith.constant 0 : i32
    return %arg0, %arg1, %arg2, %c0_i32 : i32, i32, i32, i32
  }
}

</mosaic_0001>

<llo_original>
// kernel: tpu_custom_call.1
$region0: #{tpu_custom_call.1}
  #allocation0 [shape = 'u32[]', space=smem, size = 0x4, offset = 0x4, fixed_abs, tag = 'smem constant byte address 0x4 - core index']
  #allocation1 [shape = 'u32[144,128]{1,0:T(1,128)}', space=vmem, size = 0x12000, scoped, tag = 'internal scratch']
  #allocation2 [shape = 'f32[2,8,1]{2,1,0:T(8,128)}', space=vmem, size = 0x2000, scoped, tag = 'scratch operand']
  #allocation3 [shape = 'f32[2,8,1]{2,1,0:T(8,128)}', space=vmem, size = 0x2000, scoped, tag = 'scratch operand']
  #allocation4 [shape = 'f32[2,8,16]{2,1,0:T(8,128)}', space=vmem, size = 0x2000, scoped, tag = 'scratch operand']
  %s0 = inlined_call_operand.hbm [shape: bf16[2,8,8], index: 0, kind: input, shape index: {}]
  %s1 = inlined_call_operand.hbm [shape: bf16[2,2,8,16], index: 1, kind: input, shape index: {}]
  %s2 = inlined_call_operand.hbm [shape: bf16[2,2,8,16], index: 2, kind: input, shape index: {}]
  %s3 = inlined_call_operand.hbm [shape: bf16[2,2,8,16], index: 3, kind: input, shape index: {}]
  %s4 = inlined_call_operand.hbm [shape: f32[2,2,8,16], index: 4, kind: output, shape index: {}]
  %s5 = sld [smem:[#allocation0]]
  $region73: #{tpu_custom_call.1} parent=0
    _
  %s7 = ssub.s32 1, %s5
  %s8 = scalar_select 0, %s7, %s5
  $region1: #{tpu_custom_call.1} parent=0
    #allocation5 [shape = 'u8[4096]{0}', space=vmem, size = 0x1000, scoped, tag = 'input window, operand 0']
    #allocation6 [shape = 's32[2]{0}', space=sflag, size = 0x8, scoped, tag = 'scoped memory for tpu_custom_call.1']
    #allocation7 [shape = 's32[2]{0}', space=sflag, size = 0x8, scoped, tag = 'scoped memory for tpu_custom_call.1']
    #allocation8 [shape = 'u8[8192]{0}', space=vmem, size = 0x2000, scoped, tag = 'input window, operand 1']
    #allocation9 [shape = 's32[2]{0}', space=sflag, size = 0x8, scoped, tag = 'scoped memory for tpu_custom_call.1']
    #allocation10 [shape = 'u8[8192]{0}', space=vmem, size = 0x2000, scoped, tag = 'input window, operand 2']
    #allocation11 [shape = 'u8[8192]{0}', space=vmem, size = 0x2000, scoped, tag = 'input window, operand 3']
    #allocation12 [shape = 's32[2]{0}', space=sflag, size = 0x8, scoped, tag = 'scoped memory for tpu_custom_call.1']
    #allocation13 [shape = 'u8[16384]{0}', space=vmem, size = 0x4000, scoped, tag = 'output window, operand 0']
    %9 = vsyncpa [#allocation6], 0
    %s10 = scalar_lea.sflag [#allocation6], 1
    %11 = vsyncpa %s10, 0
    %12 = vsyncpa [#allocation9], 0
    %s13 = scalar_lea.sflag [#allocation9], 1
    %14 = vsyncpa %s13, 0
    %15 = vsyncpa [#allocation12], 0
    %s16 = scalar_lea.sflag [#allocation12], 1
    %17 = vsyncpa %s16, 0
    %18 = vsyncpa [#allocation7], 0
    %s19 = scalar_lea.sflag [#allocation7], 1
    %20 = vsyncpa %s19, 0
    loop: start=0, step=1, limit=4
    $region2: #{tpu_custom_call.1} parent=1 // loop_pre_header
      _
    $region3: #{tpu_custom_call.1} parent=1 // loop_header
      %s22 = sphi 0, %s26
      %p23 = scmp.ge.s32.totalorder %s22, 4
      %s29 = sphi 0, %s55
      %s30 = sphi 0, %s51
      %s31 = sphi 0, %s47
      %s32 = sphi 0, %s43
      %s33 = sphi 0, %s29
      %s34 = sphi 0, %s30
      %s35 = sphi 0, %s31
      %s36 = sphi 0, %s32
      %s37 = sphi 0, %s33
      %s38 = sphi 0, %s34
      %s39 = sphi 0, %s35
      %s40 = sphi 0, %s36
      %s62 = sphi 0, %s64
      %s65 = sphi 0, %s62
      %s66 = sphi 0, %s65
      %s82 = sphi 0, %s66
      %s92 = sphi 0, %s94
      %s95 = sphi 0, %s92
      %s96 = sphi 0, %s95
      %s112 = sphi 0, %s96
      %s122 = sphi 0, %s124
      %s125 = sphi 0, %s122
      %s126 = sphi 0, %s125
      %s142 = sphi 0, %s126
      %s152 = sphi 0, %s154
      %s155 = sphi 0, %s152
      %s156 = sphi 0, %s155
      %s172 = sphi 0, %s156
      %s182 = sphi 0, %s184
      %s185 = sphi 0, %s182
      %s186 = sphi 0, %s185
      %s202 = sphi 0, %s186
    $region4: #{tpu_custom_call.1} parent=1 // loop_header_branch
      %25 = sbr.rel (%p23) target = $region8
    $region5: #{tpu_custom_call.1} parent=1 // loop_body
      %s27 = ssub.s32 %s22, 1
      %s28 = ssub.s32 %s22, 2
      %s41 = sadd.s32 1, %s32
      %p42 = scmp.ge.s32.totalorder %s41, 1
      %s43 = scalar_select %p42, 0, %s41
      %s44 = sadd.s32 1, %s31
      %s45 = scalar_select %p42, %s44, %s31
      %p46 = scmp.ge.s32.totalorder %s45, 1
      %s47 = scalar_select %p46, 0, %s45
      %s48 = sadd.s32 1, %s30
      %s49 = scalar_select %p46, %s48, %s30
      %p50 = scmp.ge.s32.totalorder %s49, 1
      %s51 = scalar_select %p50, 0, %s49
      %s52 = sadd.s32 1, %s29
      %s53 = scalar_select %p50, %s52, %s29
      %p54 = scmp.ge.s32.totalorder %s53, 2
      %s55 = scalar_select %p54, 0, %s53
      %s56 = ssub.s32 %s29, %s55
      %s57 = ssub.s32 %s31, %s47
      %s58 = sor.u32 %s56, %s57
      %s59 = ssub.s32 %s32, %s43
      %s60 = sor.u32 %s58, %s59
      %p61 = scmp.eq.s32.totalorder %s60, 0
      %s63 = sadd.s32 %s62, 1
      %s64 = scalar_select %p61, %s62, %s63
      %p67 = pneg %p61
      %p68 = scmp.eq.s32.totalorder %s22, 1
      %p69 = por %p67, %p68
      %p70 = scmp.ne.s32.totalorder %s62, %s65
      %p71 = scmp.eq.s32.totalorder %s22, 0
      %p72 = por %p70, %p71
      %p73 = scmp.ne.s32.totalorder %s62, %s65
      %p74 = scmp.eq.s32.totalorder %s27, 1
      %p75 = por %p73, %p74
      %p76 = scmp.ne.s32.totalorder %s65, %s66
      %p77 = scmp.eq.s32.totalorder %s27, 0
      %p78 = por %p76, %p77
      %p79 = scmp.ne.s32.totalorder %s65, %s66
      %p80 = scmp.eq.s32.totalorder %s28, 1
      %p81 = por %p79, %p80
      %p83 = scmp.ne.s32.totalorder %s66, %s82
      %p84 = scmp.eq.s32.totalorder %s28, 0
      %p85 = por %p83, %p84
      %s86 = ssub.s32 %s29, %s55
      %s87 = ssub.s32 %s30, %s51
      %s88 = sor.u32 %s86, %s87
      %s89 = ssub.s32 %s31, %s47
      %s90 = sor.u32 %s88, %s89
      %p91 = scmp.eq.s32.totalorder %s90, 0
      %s93 = sadd.s32 %s92, 1
      %s94 = scalar_select %p91, %s92, %s93
      %p97 = pneg %p91
      %p98 = scmp.eq.s32.totalorder %s22, 1
      %p99 = por %p97, %p98
      %p100 = scmp.ne.s32.totalorder %s92, %s95
      %p101 = scmp.eq.s32.totalorder %s22, 0
      %p102 = por %p100, %p101
      %p103 = scmp.ne.s32.totalorder %s92, %s95
      %p104 = scmp.eq.s32.totalorder %s27, 1
      %p105 = por %p103, %p104
      %p106 = scmp.ne.s32.totalorder %s95, %s96
      %p107 = scmp.eq.s32.totalorder %s27, 0
      %p108 = por %p106, %p107
      %p109 = scmp.ne.s32.totalorder %s95, %s96
      %p110 = scmp.eq.s32.totalorder %s28, 1
      %p111 = por %p109, %p110
      %p113 = scmp.ne.s32.totalorder %s96, %s112
      %p114 = scmp.eq.s32.totalorder %s28, 0
      %p115 = por %p113, %p114
      %s116 = ssub.s32 %s29, %s55
      %s117 = ssub.s32 %s30, %s51
      %s118 = sor.u32 %s116, %s117
      %s119 = ssub.s32 %s32, %s43
      %s120 = sor.u32 %s118, %s119
      %p121 = scmp.eq.s32.totalorder %s120, 0
      %s123 = sadd.s32 %s122, 1
      %s124 = scalar_select %p121, %s122, %s123
      %p127 = pneg %p121
      %p128 = scmp.eq.s32.totalorder %s22, 1
      %p129 = por %p127, %p128
      %p130 = scmp.ne.s32.totalorder %s122, %s125
      %p131 = scmp.eq.s32.totalorder %s22, 0
      %p132 = por %p130, %p131
      %p133 = scmp.ne.s32.totalorder %s122, %s125
      %p134 = scmp.eq.s32.totalorder %s27, 1
      %p135 = por %p133, %p134
      %p136 = scmp.ne.s32.totalorder %s125, %s126
      %p137 = scmp.eq.s32.totalorder %s27, 0
      %p138 = por %p136, %p137
      %p139 = scmp.ne.s32.totalorder %s125, %s126
      %p140 = scmp.eq.s32.totalorder %s28, 1
      %p141 = por %p139, %p140
      %p143 = scmp.ne.s32.totalorder %s126, %s142
      %p144 = scmp.eq.s32.totalorder %s28, 0
      %p145 = por %p143, %p144
      %s146 = ssub.s32 %s29, %s55
      %s147 = ssub.s32 %s30, %s51
      %s148 = sor.u32 %s146, %s147
      %s149 = ssub.s32 %s32, %s43
      %s150 = sor.u32 %s148, %s149
      %p151 = scmp.eq.s32.totalorder %s150, 0
      %s153 = sadd.s32 %s152, 1
      %s154 = scalar_select %p151, %s152, %s153
      %p157 = pneg %p151
      %p158 = scmp.eq.s32.totalorder %s22, 1
      %p159 = por %p157, %p158
      %p160 = scmp.ne.s32.totalorder %s152, %s155
      %p161 = scmp.eq.s32.totalorder %s22, 0
      %p162 = por %p160, %p161
      %p163 = scmp.ne.s32.totalorder %s152, %s155
      %p164 = scmp.eq.s32.totalorder %s27, 1
      %p165 = por %p163, %p164
      %p166 = scmp.ne.s32.totalorder %s155, %s156
      %p167 = scmp.eq.s32.totalorder %s27, 0
      %p168 = por %p166, %p167
      %p169 = scmp.ne.s32.totalorder %s155, %s156
      %p170 = scmp.eq.s32.totalorder %s28, 1
      %p171 = por %p169, %p170
      %p173 = scmp.ne.s32.totalorder %s156, %s172
      %p174 = scmp.eq.s32.totalorder %s28, 0
      %p175 = por %p173, %p174
      %s176 = ssub.s32 %s29, %s55
      %s177 = ssub.s32 %s30, %s51
      %s178 = sor.u32 %s176, %s177
      %s179 = ssub.s32 %s31, %s47
      %s180 = sor.u32 %s178, %s179
      %p181 = scmp.eq.s32.totalorder %s180, 0
      %s183 = sadd.s32 %s182, 1
      %s184 = scalar_select %p181, %s182, %s183
      %p187 = pneg %p181
      %p188 = scmp.eq.s32.totalorder %s22, 1
      %p189 = por %p187, %p188
      %p190 = scmp.ne.s32.totalorder %s182, %s185
      %p191 = scmp.eq.s32.totalorder %s22, 0
      %p192 = por %p190, %p191
      %p193 = scmp.ne.s32.totalorder %s182, %s185
      %p194 = scmp.eq.s32.totalorder %s27, 1
      %p195 = por %p193, %p194
      %p196 = scmp.ne.s32.totalorder %s185, %s186
      %p197 = scmp.eq.s32.totalorder %s27, 0
      %p198 = por %p196, %p197
      %p199 = scmp.ne.s32.totalorder %s185, %s186
      %p200 = scmp.eq.s32.totalorder %s28, 1
      %p201 = por %p199, %p200
      %p203 = scmp.ne.s32.totalorder %s186, %s202
      %p204 = scmp.eq.s32.totalorder %s28, 0
      %p205 = por %p203, %p204
      %p206 = scmp.le.s32.totalorder 1, %s22
      %p207 = scmp.lt.s32.totalorder %s22, 3
      %p208 = pnand %p206, %p207
      %p209 = pneg %p208
      // Predicated region
      $region9: #{tpu_custom_call.1} parent=5 // pred_check
        _
      $region10: #{tpu_custom_call.1} parent=5 // pred_check_branch
        %211 = sbr.rel (%p208) target = $region12
      $region11: #{tpu_custom_call.1} parent=5 // pred_region
        %s212 = ssub.s32 %s22, 1
      $region12: #{tpu_custom_call.1} parent=5 // pred_fallthru
        _
      %p213 = scmp.lt.s32.totalorder %s22, 2
      // Predicated region
      $region13: #{tpu_custom_call.1} parent=5 // pred_check
        %p214 = pneg %p213
      $region14: #{tpu_custom_call.1} parent=5 // pred_check_branch
        %216 = sbr.rel (%p214) target = $region16
      $region15: #{tpu_custom_call.1} parent=5 // pred_region
        // Predicated region
        $region17: #{tpu_custom_call.1} parent=15 // pred_check
          %p217 = pneg %p72
        $region18: #{tpu_custom_call.1} parent=15 // pred_check_branch
          %219 = sbr.rel (%p217) target = $region20
        $region19: #{tpu_custom_call.1} parent=15 // pred_region
          %s220 = sand.u32 %s62, 1
          %s221 = scalar_lea.sflag [#allocation6], %s220
          %s222 = sand.u32 %s62, 1
          %s223 = smul.addr %s222, 4
          %s224 = scalar_lea.vmem [#allocation5], %s223
          %s226 = ssub.s32 64, 64
          %227 = vsyncadd %s221, %s226
          %s228 = sadd.s32 %s32, %s31
          %s229 = sadd.s32 %s228, %s29
          %s230 = smul.addr %s229, 64
          %s231 = scalar_lea.hbm %s0, %s230
          %s233 = sshll.u32 %s224, 4
          %s234 = int_to_ptr.vmem [resolvable:$true] %s233
          %236 = dma.hbm_to_vmem [thread:$0]  %s231, 64, %s234, %s221
        $region20: #{tpu_custom_call.1} parent=15 // pred_fallthru
          _
        // Predicated region
        $region21: #{tpu_custom_call.1} parent=15 // pred_check
          %p237 = pneg %p102
        $region22: #{tpu_custom_call.1} parent=15 // pred_check_branch
          %239 = sbr.rel (%p237) target = $region24
        $region23: #{tpu_custom_call.1} parent=15 // pred_region
          %s240 = sand.u32 %s22, 1
          %s241 = scalar_lea.sflag [#allocation9], %s240
          %s242 = sand.u32 %s92, 1
          %s243 = smul.addr %s242, 8
          %s244 = scalar_lea.vmem [#allocation8], %s243
          %s245 = smul.u32 2, %s30
          %s247 = ssub.s32 128, 128
          %248 = vsyncadd %s241, %s247
          %s249 = sadd.s32 %s31, %s245
          %s250 = smul.addr %s29, 2
          %s251 = sadd.s32 %s249, %s250
          %s252 = smul.addr %s251, 64
          %s253 = scalar_lea.hbm %s1, %s252
          %s254 = sshll.u32 %s244, 4
          %s255 = int_to_ptr.vmem [resolvable:$true] %s254
          %260 = dma.hbm_to_vmem [thread:$0]  %s253, 128, %s255, %s241, 64, 64, 4
        $region24: #{tpu_custom_call.1} parent=15 // pred_fallthru
          _
        // Predicated region
        $region25: #{tpu_custom_call.1} parent=15 // pred_check
          %p261 = pneg %p132
        $region26: #{tpu_custom_call.1} parent=15 // pred_check_branch
          %263 = sbr.rel (%p261) target = $region28
        $region27: #{tpu_custom_call.1} parent=15 // pred_region
          %s264 = sand.u32 %s22, 1
          %s265 = scalar_lea.sflag [#allocation9], %s264
          %s266 = sand.u32 %s122, 1
          %s267 = smul.addr %s266, 8
          %s268 = scalar_lea.vmem [#allocation10], %s267
          %s269 = smul.u32 2, %s30
          %s271 = ssub.s32 128, 128
          %272 = vsyncadd %s265, %s271
          %s273 = sadd.s32 %s32, %s269
          %s274 = smul.addr %s29, 2
          %s275 = sadd.s32 %s273, %s274
          %s276 = smul.addr %s275, 64
          %s277 = scalar_lea.hbm %s2, %s276
          %s278 = sshll.u32 %s268, 4
          %s279 = int_to_ptr.vmem [resolvable:$true] %s278
          %284 = dma.hbm_to_vmem [thread:$0]  %s277, 128, %s279, %s265, 64, 64, 4
        $region28: #{tpu_custom_call.1} parent=15 // pred_fallthru
          _
        // Predicated region
        $region29: #{tpu_custom_call.1} parent=15 // pred_check
          %p285 = pneg %p162
        $region30: #{tpu_custom_call.1} parent=15 // pred_check_branch
          %287 = sbr.rel (%p285) target = $region32
        $region31: #{tpu_custom_call.1} parent=15 // pred_region
          %s288 = sand.u32 %s152, 1
          %s289 = scalar_lea.sflag [#allocation12], %s288
          %s290 = sand.u32 %s152, 1
          %s291 = smul.addr %s290, 8
          %s292 = scalar_lea.vmem [#allocation11], %s291
          %s293 = smul.u32 2, %s30
          %s295 = ssub.s32 128, 128
          %296 = vsyncadd %s289, %s295
          %s297 = sadd.s32 %s32, %s293
          %s298 = smul.addr %s29, 2
          %s299 = sadd.s32 %s297, %s298
          %s300 = smul.addr %s299, 64
          %s301 = scalar_lea.hbm %s3, %s300
          %s302 = sshll.u32 %s292, 4
          %s303 = int_to_ptr.vmem [resolvable:$true] %s302
          %308 = dma.hbm_to_vmem [thread:$0]  %s301, 128, %s303, %s289, 64, 64, 4
        $region32: #{tpu_custom_call.1} parent=15 // pred_fallthru
          _
      $region16: #{tpu_custom_call.1} parent=5 // pred_fallthru
        _
      %p309 = scmp.le.s32.totalorder 1, %s22
      %p310 = scmp.lt.s32.totalorder %s22, 3
      %p311 = pnand %p309, %p310
      %p312 = pneg %p311
      // Predicated region
      $region33: #{tpu_custom_call.1} parent=5 // pred_check
        _
      $region34: #{tpu_custom_call.1} parent=5 // pred_check_branch
        %314 = sbr.rel (%p311) target = $region36
      $region35: #{tpu_custom_call.1} parent=5 // pred_region
        %s315 = ssub.s32 %s22, 1
        %s316 = sand.u32 %s65, 1
        %s317 = scalar_lea.sflag [#allocation6], %s316
        %s318 = sand.u32 %s65, 1
        %s319 = smul.addr %s318, 4
        %s320 = scalar_lea.vmem [#allocation5], %s319
        // Predicated region
        $region37: #{tpu_custom_call.1} parent=35 // pred_check
          %p321 = pneg %p78
        $region38: #{tpu_custom_call.1} parent=35 // pred_check_branch
          %323 = sbr.rel (%p321) target = $region40
        $region39: #{tpu_custom_call.1} parent=35 // pred_region
          %324 = dma.done %s317, 64
        $region40: #{tpu_custom_call.1} parent=35 // pred_fallthru
          _
        %s325 = sand.u32 %s27, 1
        %s326 = scalar_lea.sflag [#allocation9], %s325
        %s327 = sand.u32 %s95, 1
        %s328 = smul.addr %s327, 8
        %s329 = scalar_lea.vmem [#allocation8], %s328
        // Predicated region
        $region41: #{tpu_custom_call.1} parent=35 // pred_check
          %p330 = pneg %p108
        $region42: #{tpu_custom_call.1} parent=35 // pred_check_branch
          %332 = sbr.rel (%p330) target = $region44
        $region43: #{tpu_custom_call.1} parent=35 // pred_region
          %333 = dma.done %s326, 128
        $region44: #{tpu_custom_call.1} parent=35 // pred_fallthru
          _
        %s334 = sand.u32 %s27, 1
        %s335 = scalar_lea.sflag [#allocation9], %s334
        %s336 = sand.u32 %s125, 1
        %s337 = smul.addr %s336, 8
        %s338 = scalar_lea.vmem [#allocation10], %s337
        // Predicated region
        $region45: #{tpu_custom_call.1} parent=35 // pred_check
          %p339 = pneg %p138
        $region46: #{tpu_custom_call.1} parent=35 // pred_check_branch
          %341 = sbr.rel (%p339) target = $region48
        $region47: #{tpu_custom_call.1} parent=35 // pred_region
          %342 = dma.done %s335, 128
        $region48: #{tpu_custom_call.1} parent=35 // pred_fallthru
          _
        %s343 = sand.u32 %s155, 1
        %s344 = scalar_lea.sflag [#allocation12], %s343
        %s345 = sand.u32 %s155, 1
        %s346 = smul.addr %s345, 8
        %s347 = scalar_lea.vmem [#allocation11], %s346
        // Predicated region
        $region49: #{tpu_custom_call.1} parent=35 // pred_check
          %p348 = pneg %p168
        $region50: #{tpu_custom_call.1} parent=35 // pred_check_branch
          %350 = sbr.rel (%p348) target = $region52
        $region51: #{tpu_custom_call.1} parent=35 // pred_region
          %351 = dma.done %s344, 128
        $region52: #{tpu_custom_call.1} parent=35 // pred_fallthru
          _
        %s352 = sand.u32 %s65, 1
        %s353 = scalar_lea.sflag [#allocation6], %s352
        %s354 = sand.u32 %s65, 1
        %s355 = smul.addr %s354, 4
        %s356 = scalar_lea.vmem [#allocation5], %s355
        %p357 = pneg %p78
        %p358 = pneg %p75
        %s359 = sand.u32 %s27, 1
        %s360 = scalar_lea.sflag [#allocation9], %s359
        %s361 = sand.u32 %s95, 1
        %s362 = smul.addr %s361, 8
        %s363 = scalar_lea.vmem [#allocation8], %s362
        %p364 = pneg %p108
        %p365 = pneg %p105
        %s366 = sand.u32 %s27, 1
        %s367 = scalar_lea.sflag [#allocation9], %s366
        %s368 = sand.u32 %s125, 1
        %s369 = smul.addr %s368, 8
        %s370 = scalar_lea.vmem [#allocation10], %s369
        %p371 = pneg %p138
        %p372 = pneg %p135
        %s373 = sand.u32 %s155, 1
        %s374 = scalar_lea.sflag [#allocation12], %s373
        %s375 = sand.u32 %s155, 1
        %s376 = smul.addr %s375, 8
        %s377 = scalar_lea.vmem [#allocation11], %s376
        %p378 = pneg %p168
        %p379 = pneg %p165
        %p380 = pneg %p198
        %p381 = pneg %p195
        %s382 = sand.u32 %s185, 1
        %s383 = scalar_lea.sflag [#allocation7], %s382
        %s384 = sand.u32 %s185, 1
        %s385 = smul.addr %s384, 16
        %s386 = scalar_lea.vmem [#allocation13], %s385
        %s387 = smul.u32 2, %s34
        %s388 = smul.u32 2, %s34
        %s389 = smul.u32 2, %s34
        %s390 = smul.u32 2, %s34
        %p392 = scmp.eq.s32.totalorder %s36, 0
        // Predicated region
        $region53: #{tpu_custom_call.1} parent=35 // pred_check
          %p393 = pneg %p392
        $region54: #{tpu_custom_call.1} parent=35 // pred_check_branch
          %395 = sbr.rel (%p393) target = $region56
        $region55: #{tpu_custom_call.1} parent=35 // pred_region
          %vm396 = vcmask 7168
          %397 = vst.msk [vmem:[#allocation2] sm:$0xff] %vm396, -1e+30
          %398 = vst.msk [vmem:[#allocation2 + $0x8] sm:$0xff] %vm396, -1e+30
          %399 = vst.msk [vmem:[#allocation3] sm:$0xff] %vm396, 0.0
          %400 = vst.msk [vmem:[#allocation3 + $0x8] sm:$0xff] %vm396, 0.0
          %vm401 = vcmask 130048
          %402 = vst.msk [vmem:[#allocation4] sm:$0xff] %vm401, 0.0
          %403 = vst.msk [vmem:[#allocation4 + $0x8] sm:$0xff] %vm401, 0.0
        $region56: #{tpu_custom_call.1} parent=35 // pred_fallthru
          _
        %v404 = vld [vmem:[%s329] sm:$0xf]
        %v405 = vld [vmem:[%s329 + $0x4] sm:$0xf]
        %v406 = vld [vmem:[%s338] sm:$0xf]
        %v407 = vld [vmem:[%s338 + $0x4] sm:$0xf]
        %v408 = vld [vmem:[%s347] sm:$0xf]
        %v409 = vld [vmem:[%s347 + $0x4] sm:$0xf]
        %v410 = vld [vmem:[%s320] sm:$0xf]
        %v411 = vunpack.c.l.bf16 %v410
        %vm412 = vcmask 130048
        %v414 = vsel %vm412, %v404, 0
        %v417 = vsel %vm412, %v406, 0
        %419 = vmatprep.subr.bf16.mxu0 0
        %420 = vmatpush1.bf16.xpose.msra.mxu0 0
        %421 = vmatprep.subr.bf16.mxu0 0
        %422 = vmatpush1.bf16.xpose.msra.mxu0 0
        %423 = vmatprep.subr.bf16.mxu0 0
        %424 = vmatpush1.bf16.xpose.msra.mxu0 0
        %425 = vmatprep.subr.bf16.mxu0 0
        %426 = vmatpush1.bf16.xpose.msra.mxu0 0
        %427 = vmatprep.subr.bf16.mxu0 0
        %428 = vmatpush1.bf16.xpose.msra.mxu0 0
        %429 = vmatprep.subr.bf16.mxu0 0
        %430 = vmatpush1.bf16.xpose.msra.mxu0 0
        %431 = vmatprep.subr.bf16.mxu0 0
        %432 = vmatpush1.bf16.xpose.msra.mxu0 0
        %433 = vmatprep.subr.bf16.mxu0 0
        %434 = vmatpush1.bf16.xpose.msra.mxu0 %v417
        %435 = vmatprep.subr.bf16.mxu0 0
        %436 = vmatpush2.bf16.xpose.msra.mxu0 0
        %437 = vmatprep.subr.bf16.mxu0 0
        %438 = vmatpush2.bf16.xpose.msra.mxu0 0
        %439 = vmatprep.subr.bf16.mxu0 0
        %440 = vmatpush2.bf16.xpose.msra.mxu0 0
        %441 = vmatprep.subr.bf16.mxu0 0
        %442 = vmatpush2.bf16.xpose.msra.mxu0 0
        %443 = vmatprep.subr.bf16.mxu0 0
        %444 = vmatpush2.bf16.xpose.msra.mxu0 0
        %445 = vmatprep.subr.bf16.mxu0 0
        %446 = vmatpush2.bf16.xpose.msra.mxu0 0
        %447 = vmatprep.subr.bf16.mxu0 0
        %448 = vmatpush2.bf16.xpose.msra.mxu0 0
        %449 = vmatprep.subr.bf16.mxu0 0
        %450 = vmatpush2.bf16.xpose.msra.mxu0 0
        %451 = vmatprep.mubr.bf16.mxu0 0
        %452 = vmatmul.mubr.bf16.gmra.mxu0 %v414
        %v453 = vpop.f32.mrf.mxu0
        %v454 = vadd.f32 %v411, %v453
        %v455 = vpop.f32.mrf.mxu0
        %v456 = vpop.f32.mrf.mxu0
        %v457 = vpop.f32.mrf.mxu0
        %458 = vdwg.mxu0
        %v460 = vsel %vm412, %v405, 0
        %v463 = vsel %vm412, %v407, 0
        %465 = vmatprep.subr.bf16.mxu0 0
        %466 = vmatpush1.bf16.xpose.msra.mxu0 0
        %467 = vmatprep.subr.bf16.mxu0 0
        %468 = vmatpush1.bf16.xpose.msra.mxu0 0
        %469 = vmatprep.subr.bf16.mxu0 0
        %470 = vmatpush1.bf16.xpose.msra.mxu0 0
        %471 = vmatprep.subr.bf16.mxu0 0
        %472 = vmatpush1.bf16.xpose.msra.mxu0 0
        %473 = vmatprep.subr.bf16.mxu0 0
        %474 = vmatpush1.bf16.xpose.msra.mxu0 0
        %475 = vmatprep.subr.bf16.mxu0 0
        %476 = vmatpush1.bf16.xpose.msra.mxu0 0
        %477 = vmatprep.subr.bf16.mxu0 0
        %478 = vmatpush1.bf16.xpose.msra.mxu0 0
        %479 = vmatprep.subr.bf16.mxu0 0
        %480 = vmatpush1.bf16.xpose.msra.mxu0 %v463
        %481 = vmatprep.subr.bf16.mxu0 0
        %482 = vmatpush2.bf16.xpose.msra.mxu0 0
        %483 = vmatprep.subr.bf16.mxu0 0
        %484 = vmatpush2.bf16.xpose.msra.mxu0 0
        %485 = vmatprep.subr.bf16.mxu0 0
        %486 = vmatpush2.bf16.xpose.msra.mxu0 0
        %487 = vmatprep.subr.bf16.mxu0 0
        %488 = vmatpush2.bf16.xpose.msra.mxu0 0
        %489 = vmatprep.subr.bf16.mxu0 0
        %490 = vmatpush2.bf16.xpose.msra.mxu0 0
        %491 = vmatprep.subr.bf16.mxu0 0
        %492 = vmatpush2.bf16.xpose.msra.mxu0 0
        %493 = vmatprep.subr.bf16.mxu0 0
        %494 = vmatpush2.bf16.xpose.msra.mxu0 0
        %495 = vmatprep.subr.bf16.mxu0 0
        %496 = vmatpush2.bf16.xpose.msra.mxu0 0
        %497 = vmatprep.mubr.bf16.mxu0 0
        %498 = vmatmul.mubr.bf16.gmra.mxu0 %v460
        %v499 = vpop.f32.mrf.mxu0
        %v500 = vadd.f32 %v411, %v499
        %v501 = vpop.f32.mrf.mxu0
        %v502 = vpop.f32.mrf.mxu0
        %v503 = vpop.f32.mrf.mxu0
        %504 = vdwg.mxu0
        %v505 = vld [vmem:[#allocation2] sm:$0xff]
        %v506 = vld [vmem:[#allocation2 + $0x8] sm:$0xff]
        %vm507 = vcmask 64512
        %v508 = vsel %vm507, %v454, -inf
        %509 = vmax.xlane.f32.xlu0 %v508
        %v510 = vpop.xlane.xlu0 %509
        %v511 = vsel %vm507, %v500, -inf
        %512 = vmax.xlane.f32.xlu0 %v511
        %v513 = vpop.xlane.xlu0 %512
        %v514 = vmax.f32 %v505, %v510
        %v515 = vmax.f32 %v506, %v513
        %v516 = vsub.f32 %v505, %v514
        %v517 = vsub.f32 %v506, %v515
        %v518 = vmul.f32 %v516, 1.442695
        %v519 = vpow.pop %v518
        %v520 = vmul.f32 %v517, 1.442695
        %v521 = vpow.pop %v520
        %523 = vset.pattern.permute.xlu0 0
        %524 = vperm.xlu0 %523, %v514
        %v525 = vpop.permute.xlu0 %524
        %528 = vset.pattern.permute.xlu0 0
        %529 = vperm.xlu0 %528, %v515
        %v530 = vpop.permute.xlu0 %529
        %v532 = vsub.f32 %v454, %v525
        %v533 = vsub.f32 %v500, %v530
        %v534 = vmul.f32 %v532, 1.442695
        %v535 = vpow.pop %v534
        %v536 = vmul.f32 %v533, 1.442695
        %v537 = vpow.pop %v536
        %v538 = vld [vmem:[#allocation3] sm:$0xff]
        %v539 = vld [vmem:[#allocation3 + $0x8] sm:$0xff]
        %v540 = vmul.f32 %v519, %v538
        %v541 = vmul.f32 %v521, %v539
        %v542 = vsel %vm507, %v535, 0.0
        %543 = vadd.xlane.f32.xlu0 %v542
        %v544 = vpop.xlane.xlu0 %543
        %v545 = vsel %vm507, %v537, 0.0
        %546 = vadd.xlane.f32.xlu0 %v545
        %v547 = vpop.xlane.xlu0 %546
        %v548 = vadd.f32 %v540, %v544
        %v549 = vadd.f32 %v541, %v547
        %vm550 = vcmask 7168
        %551 = vst.msk [vmem:[#allocation3] sm:$0xff] %vm550, %v548
        %552 = vst.msk [vmem:[#allocation3 + $0x8] sm:$0xff] %vm550, %v549
        %v553 = vld [vmem:[#allocation4] sm:$0xff]
        %v554 = vld [vmem:[#allocation4 + $0x8] sm:$0xff]
        %556 = vset.pattern.permute.xlu0 0
        %557 = vperm.xlu0 %556, %v519
        %v558 = vpop.permute.xlu0 %557
        %561 = vset.pattern.permute.xlu0 0
        %562 = vperm.xlu0 %561, %v521
        %v563 = vpop.permute.xlu0 %562
        %v565 = vmul.f32 %v558, %v553
        %v566 = vmul.f32 %v563, %v554
        %v567 = vpack.c.bf16 %v535, %v535
        %v568 = vpack.c.bf16 %v537, %v537
        %v570 = vsel %vm507, %v567, 0
        %vm572 = vcmask 1043456
        %v574 = vsel %vm572, %v408, 0
        %576 = vmatprep.subr.bf16.mxu0 0
        %577 = vmatpush1.bf16.msra.mxu0 0
        %578 = vmatprep.subr.bf16.mxu0 0
        %579 = vmatpush1.bf16.msra.mxu0 0
        %580 = vmatprep.subr.bf16.mxu0 0
        %581 = vmatpush1.bf16.msra.mxu0 0
        %582 = vmatprep.subr.bf16.mxu0 0
        %583 = vmatpush1.bf16.msra.mxu0 0
        %584 = vmatprep.subr.bf16.mxu0 0
        %585 = vmatpush1.bf16.msra.mxu0 0
        %586 = vmatprep.subr.bf16.mxu0 0
        %587 = vmatpush1.bf16.msra.mxu0 0
        %588 = vmatprep.subr.bf16.mxu0 0
        %589 = vmatpush1.bf16.msra.mxu0 0
        %590 = vmatprep.subr.bf16.mxu0 0
        %591 = vmatpush1.bf16.msra.mxu0 %v574
        %592 = vmatprep.subr.bf16.mxu0 0
        %593 = vmatpush2.bf16.msra.mxu0 0
        %594 = vmatprep.subr.bf16.mxu0 0
        %595 = vmatpush2.bf16.msra.mxu0 0
        %596 = vmatprep.subr.bf16.mxu0 0
        %597 = vmatpush2.bf16.msra.mxu0 0
        %598 = vmatprep.subr.bf16.mxu0 0
        %599 = vmatpush2.bf16.msra.mxu0 0
        %600 = vmatprep.subr.bf16.mxu0 0
        %601 = vmatpush2.bf16.msra.mxu0 0
        %602 = vmatprep.subr.bf16.mxu0 0
        %603 = vmatpush2.bf16.msra.mxu0 0
        %604 = vmatprep.subr.bf16.mxu0 0
        %605 = vmatpush2.bf16.msra.mxu0 0
        %606 = vmatprep.subr.bf16.mxu0 0
        %607 = vmatpush2.bf16.msra.mxu0 0
        %608 = vmatprep.mubr.bf16.mxu0 0
        %609 = vmatmul.mubr.bf16.gmra.mxu0 %v570
        %v610 = vpop.f32.mrf.mxu0
        %v611 = vadd.f32 0.0, %v610
        %v612 = vpop.f32.mrf.mxu0
        %v613 = vpop.f32.mrf.mxu0
        %v614 = vpop.f32.mrf.mxu0
        %615 = vdwg.mxu0
        %v617 = vsel %vm507, %v568, 0
        %v620 = vsel %vm572, %v409, 0
        %622 = vmatprep.subr.bf16.mxu0 0
        %623 = vmatpush1.bf16.msra.mxu0 0
        %624 = vmatprep.subr.bf16.mxu0 0
        %625 = vmatpush1.bf16.msra.mxu0 0
        %626 = vmatprep.subr.bf16.mxu0 0
        %627 = vmatpush1.bf16.msra.mxu0 0
        %628 = vmatprep.subr.bf16.mxu0 0
        %629 = vmatpush1.bf16.msra.mxu0 0
        %630 = vmatprep.subr.bf16.mxu0 0
        %631 = vmatpush1.bf16.msra.mxu0 0
        %632 = vmatprep.subr.bf16.mxu0 0
        %633 = vmatpush1.bf16.msra.mxu0 0
        %634 = vmatprep.subr.bf16.mxu0 0
        %635 = vmatpush1.bf16.msra.mxu0 0
        %636 = vmatprep.subr.bf16.mxu0 0
        %637 = vmatpush1.bf16.msra.mxu0 %v620
        %638 = vmatprep.subr.bf16.mxu0 0
        %639 = vmatpush2.bf16.msra.mxu0 0
        %640 = vmatprep.subr.bf16.mxu0 0
        %641 = vmatpush2.bf16.msra.mxu0 0
        %642 = vmatprep.subr.bf16.mxu0 0
        %643 = vmatpush2.bf16.msra.mxu0 0
        %644 = vmatprep.subr.bf16.mxu0 0
        %645 = vmatpush2.bf16.msra.mxu0 0
        %646 = vmatprep.subr.bf16.mxu0 0
        %647 = vmatpush2.bf16.msra.mxu0 0
        %648 = vmatprep.subr.bf16.mxu0 0
        %649 = vmatpush2.bf16.msra.mxu0 0
        %650 = vmatprep.subr.bf16.mxu0 0
        %651 = vmatpush2.bf16.msra.mxu0 0
        %652 = vmatprep.subr.bf16.mxu0 0
        %653 = vmatpush2.bf16.msra.mxu0 0
        %654 = vmatprep.mubr.bf16.mxu0 0
        %655 = vmatmul.mubr.bf16.gmra.mxu0 %v617
        %v656 = vpop.f32.mrf.mxu0
        %v657 = vadd.f32 0.0, %v656
        %v658 = vpop.f32.mrf.mxu0
        %v659 = vpop.f32.mrf.mxu0
        %v660 = vpop.f32.mrf.mxu0
        %661 = vdwg.mxu0
        %v662 = vadd.f32 %v565, %v611
        %v663 = vadd.f32 %v566, %v657
        %664 = vst.msk [vmem:[#allocation4] sm:$0xff] %vm412, %v662
        %665 = vst.msk [vmem:[#allocation4 + $0x8] sm:$0xff] %vm412, %v663
        %666 = vst.msk [vmem:[#allocation2] sm:$0xff] %vm550, %v514
        %667 = vst.msk [vmem:[#allocation2 + $0x8] sm:$0xff] %vm550, %v515
        // Predicated region
        $region57: #{tpu_custom_call.1} parent=35 // pred_check
          %p668 = pneg %p392
        $region58: #{tpu_custom_call.1} parent=35 // pred_check_branch
          %670 = sbr.rel (%p668) target = $region60
        $region59: #{tpu_custom_call.1} parent=35 // pred_region
          %v671 = vld [vmem:[#allocation3] sm:$0xff]
          %v672 = vld [vmem:[#allocation3 + $0x8] sm:$0xff]
          %vm673 = vcmp.gt.f32.partialorder %v671, 0.0
          %vm674 = vcmp.gt.f32.partialorder %v672, 0.0
          %v675 = vrcp.pop %v671
          %v676 = vrcp.pop %v672
          %v677 = vsel %vm673, %v675, 0.0
          %v678 = vsel %vm674, %v676, 0.0
          %v679 = vld [vmem:[#allocation4] sm:$0xff]
          %v680 = vld [vmem:[#allocation4 + $0x8] sm:$0xff]
          %682 = vset.pattern.permute.xlu0 0
          %683 = vperm.xlu0 %682, %v677
          %v684 = vpop.permute.xlu0 %683
          %687 = vset.pattern.permute.xlu0 0
          %688 = vperm.xlu0 %687, %v678
          %v689 = vpop.permute.xlu0 %688
          %v691 = vmul.f32 %v679, %v684
          %v692 = vmul.f32 %v680, %v689
          %693 = vst.msk [vmem:[%s386] sm:$0xff] %vm412, %v691
          %694 = vst.msk [vmem:[%s386 + $0x8] sm:$0xff] %vm412, %v692
        $region60: #{tpu_custom_call.1} parent=35 // pred_fallthru
          _
        %s695 = sand.u32 %s185, 1
        %s696 = scalar_lea.sflag [#allocation7], %s695
        %s697 = sand.u32 %s185, 1
        %s698 = smul.addr %s697, 16
        %s699 = scalar_lea.vmem [#allocation13], %s698
        // Predicated region
        $region61: #{tpu_custom_call.1} parent=35 // pred_check
          %p700 = pneg %p195
        $region62: #{tpu_custom_call.1} parent=35 // pred_check_branch
          %702 = sbr.rel (%p700) target = $region64
        $region63: #{tpu_custom_call.1} parent=35 // pred_region
          %s703 = smul.u32 2, %s34
          %s705 = ssub.s32 256, 256
          %706 = vsyncadd %s696, %s705
          %s707 = sadd.s32 %s35, %s703
          %s708 = smul.addr %s33, 2
          %s709 = sadd.s32 %s707, %s708
          %s710 = smul.addr %s709, 128
          %s711 = scalar_lea.hbm %s4, %s710
          %s712 = sshll.u32 %s699, 4
          %s713 = int_to_ptr.vmem [resolvable:$true] %s712
          %718 = dma.vmem_to_hbm [thread:$0]  %s713, 256, %s711, %s696, 128, 128, 8
        $region64: #{tpu_custom_call.1} parent=35 // pred_fallthru
          _
      $region36: #{tpu_custom_call.1} parent=5 // pred_fallthru
        _
      %p719 = scmp.le.s32.totalorder 2, %s22
      // Predicated region
      $region65: #{tpu_custom_call.1} parent=5 // pred_check
        %p720 = pneg %p719
      $region66: #{tpu_custom_call.1} parent=5 // pred_check_branch
        %722 = sbr.rel (%p720) target = $region68
      $region67: #{tpu_custom_call.1} parent=5 // pred_region
        %s723 = ssub.s32 %s22, 2
        // Predicated region
        $region69: #{tpu_custom_call.1} parent=67 // pred_check
          %p724 = pneg %p201
        $region70: #{tpu_custom_call.1} parent=67 // pred_check_branch
          %726 = sbr.rel (%p724) target = $region72
        $region71: #{tpu_custom_call.1} parent=67 // pred_region
          %s727 = sand.u32 %s186, 1
          %s728 = scalar_lea.sflag [#allocation7], %s727
          %s729 = sand.u32 %s186, 1
          %s730 = smul.addr %s729, 16
          %s731 = scalar_lea.vmem [#allocation13], %s730
          %732 = dma.done %s728, 256
        $region72: #{tpu_custom_call.1} parent=67 // pred_fallthru
          _
      $region68: #{tpu_custom_call.1} parent=5 // pred_fallthru
        _
    $region6: #{tpu_custom_call.1} parent=1 // loop_footer
      %s26 = sadd.s32 1, %s22
    $region7: #{tpu_custom_call.1} parent=1 // loop_footer_branch
      %21 = sbr.rel target = $region3
    $region8: #{tpu_custom_call.1} parent=1 // loop_exit
      _
    %733 = vsyncpa [#allocation6], 1
    %s734 = scalar_lea.sflag [#allocation6], 1
    %735 = vsyncpa %s734, 1
    %736 = vsyncpa [#allocation9], 1
    %s737 = scalar_lea.sflag [#allocation9], 1
    %738 = vsyncpa %s737, 1
    %739 = vsyncpa [#allocation12], 1
    %s740 = scalar_lea.sflag [#allocation12], 1
    %741 = vsyncpa %s740, 1
    %742 = vsyncpa [#allocation7], 1
    %s743 = scalar_lea.sflag [#allocation7], 1
    %744 = vsyncpa %s743, 1

</llo_original>
